<compile_context>
chip_gen: v5e
topology: v5e:2x2
jax: 0.10.0
libtpu: 0.0.40
codegen_flags: <defaults>
</compile_context>

<pallas_src>
import jax
import jax.numpy as jnp
from jax.experimental import pallas as pl
from jax.experimental.pallas import tpu as pltpu

LANE = 128            # TPU lane width; hidden layers padded to full MXU tiles
IN_DIM = 13
H1, H2, OUT_DIM = 32, 16, 2


def _round_up(n, m):
    return ((n + m - 1) // m) * m


def _tile_cap_for_device():
    """Largest batch tile that stays inside the scoped-VMEM default per generation."""
    try:
        kind = jax.devices()[0].device_kind.lower()
    except Exception:
        return 2048
    if any(tag in kind for tag in ("v6", "v7", "7x")):
        return 4096   # v6e/v7x: ~15 MiB/tile incl. double buffers, < 32 MiB default
    return 2048       # v5e: 16 MiB scoped-VMEM default


def _pick_tile_b(batch):
    cap = _tile_cap_for_device()
    # Split into >= 2 grid steps when there is enough work so ("parallel",)
    # actually shards across both v7x TensorCores (harmless on v5e/v6e).
    splits = 2 if batch > 256 else 1
    tile = _round_up(max(1, -(-batch // splits)), 8)
    return max(8, min(cap, tile))


def _mlp_kernel(x_ref, w1_ref, b1_ref, w2_ref, b2_ref, w3_ref, b3_ref, o_ref):
    # Fused hot path: 3 MXU matmuls (bf16 operands, f32 accumulation) + f32 bias/ReLU.
    x = x_ref[...].astype(jnp.bfloat16)
    h1 = jnp.dot(x, w1_ref[...], preferred_element_type=jnp.float32) + b1_ref[...]
    h1 = jnp.maximum(h1, 0.0).astype(jnp.bfloat16)
    h2 = jnp.dot(h1, w2_ref[...], preferred_element_type=jnp.float32) + b2_ref[...]
    h2 = jnp.maximum(h2, 0.0).astype(jnp.bfloat16)
    h3 = jnp.dot(h2, w3_ref[...], preferred_element_type=jnp.float32) + b3_ref[...]
    o_ref[...] = h3.astype(o_ref.dtype)   # narrow (tile_b, 2) store — 8 B/row writeback


def audio_classifier_forward(x, padded_params, tile_b=None):
    """x: [B, 13] (f32 or bf16). padded_params: dict from pad_params()."""
    w1, b1, w2, b2, w3, b3 = (
        padded_params["w1"], padded_params["b1"], padded_params["w2"],
        padded_params["b2"], padded_params["w3"], padded_params["b3"],
    )
    B, in_dim = x.shape
    assert in_dim == IN_DIM and w1.shape[0] == IN_DIM

    if tile_b is None:
        tile_b = _pick_tile_b(B)
    grid = (pl.cdiv(B, tile_b),)          # partial last block: masked output writes

    const = lambda i: (0, 0)              # weights/biases DMA'd once, VMEM-resident
    param_bytes = sum(int(p.size) * p.dtype.itemsize for p in (w1, b1, w2, b2, w3, b3))
    cost = pl.CostEstimate(
        flops=2 * B * (IN_DIM * H1 + H1 * H2 + H2 * OUT_DIM),
        transcendentals=0,
        bytes_accessed=B * IN_DIM * x.dtype.itemsize + B * OUT_DIM * 4 + param_bytes,
    )

    return pl.pallas_call(
        _mlp_kernel,
        out_shape=jax.ShapeDtypeStruct((B, OUT_DIM), jnp.float32),
        grid=grid,
        in_specs=[
            pl.BlockSpec((tile_b, IN_DIM), lambda i: (i, 0)),
            pl.BlockSpec(w1.shape, const),
            pl.BlockSpec(b1.shape, const),
            pl.BlockSpec(w2.shape, const),
            pl.BlockSpec(b2.shape, const),
            pl.BlockSpec(w3.shape, const),
            pl.BlockSpec(b3.shape, const),
        ],
        out_specs=pl.BlockSpec((tile_b, OUT_DIM), lambda i: (i, 0)),
        compiler_params=pltpu.CompilerParams(dimension_semantics=("parallel",)),
        cost_estimate=cost,
    )(x, w1, b1, w2, b2, w3, b3)


def init_params(key, input_size=IN_DIM):
    """PyTorch nn.Linear-equivalent init; weights stored as [in, out]."""
    k1, k2, k3, k4, k5, k6 = jax.random.split(key, 6)

    def u(k, shape, fan_in):
        bound = 1.0 / jnp.sqrt(jnp.float32(fan_in))
        return jax.random.uniform(k, shape, jnp.float32, -bound, bound)

    return {
        "w1": u(k1, (input_size, H1), input_size),
        "b1": u(k2, (1, H1), input_size),
        "w2": u(k3, (H1, H2), H1),
        "b2": u(k4, (1, H2), H1),
        "w3": u(k5, (H2, OUT_DIM), H2),
        "b3": u(k6, (1, OUT_DIM), H2),
    }


def pad_params(params):
    """Zero-pad hidden dims to 128 lanes (full MXU tiles); keep the final N=2 narrow.
    Weights are stored bf16 (MXU operand dtype); biases stay f32 for the f32 add."""
    def pad_to(a, shape, dtype):
        return jnp.pad(a, [(0, t - s) for s, t in zip(a.shape, shape)]).astype(dtype)

    return {
        "w1": pad_to(params["w1"], (IN_DIM, LANE), jnp.bfloat16),
        "b1": pad_to(params["b1"], (1, LANE), jnp.float32),
        "w2": pad_to(params["w2"], (LANE, LANE), jnp.bfloat16),
        "b2": pad_to(params["b2"], (1, LANE), jnp.float32),
        "w3": pad_to(params["w3"], (LANE, OUT_DIM), jnp.bfloat16),  # K padded, N stays 2
        "b3": params["b3"].astype(jnp.float32),
    }


def reference_forward_f32(x, params):
    """Plain-JAX f32 reference matching PyTorch semantics."""
    h = jnp.maximum(x @ params["w1"] + params["b1"], 0.0)
    h = jnp.maximum(h @ params["w2"] + params["b2"], 0.0)
    return h @ params["w3"] + params["b3"]


def reference_forward_bf16(x, params):
    """Reference using the kernel's exact numerics (bf16 dot operands, f32 accum)."""
    bf = jnp.bfloat16

    def dot(a, w):
        return jnp.dot(a.astype(bf), w.astype(bf), preferred_element_type=jnp.float32)

    h = jnp.maximum(dot(x, params["w1"]) + params["b1"], 0.0)
    h = jnp.maximum(dot(h, params["w2"]) + params["b2"], 0.0)
    return dot(h, params["w3"]) + params["b3"]


if __name__ == "__main__":
    key = jax.random.PRNGKey(0)
    kx, kp = jax.random.split(key)

    batch, input_size = 10, IN_DIM  # ragged batch exercises the masked partial block
    x = jax.random.normal(kx, (batch, input_size), dtype=jnp.float32)
    params = init_params(kp, input_size=input_size)
    padded = pad_params(params)

    out = audio_classifier_forward(x, padded)
    out = jax.block_until_ready(out)

    assert out.shape == (batch, OUT_DIM)
    ref_exact = reference_forward_bf16(x, params)   # same numerics as the kernel
    ref_f32 = reference_forward_f32(x, params)      # PyTorch-semantics f32 reference
    assert jnp.allclose(out, ref_exact, atol=1e-5, rtol=1e-5)
    assert jnp.allclose(out, ref_f32, atol=3e-2, rtol=3e-2)

    print("KERNEL_OK")
</pallas_src>

<mosaic_0001>
module attributes {stable_mosaic.version = 11 : i64} {
  func.func @_mlp_kernel(%arg0: i32, %arg1: memref<16x13xf32, #tpu.memory_space<vmem>>, %arg2: memref<13x128xbf16, #tpu.memory_space<vmem>>, %arg3: memref<1x128xf32, #tpu.memory_space<vmem>>, %arg4: memref<128x128xbf16, #tpu.memory_space<vmem>>, %arg5: memref<1x128xf32, #tpu.memory_space<vmem>>, %arg6: memref<128x2xbf16, #tpu.memory_space<vmem>>, %arg7: memref<1x2xf32, #tpu.memory_space<vmem>>, %arg8: memref<16x2xf32, #tpu.memory_space<vmem>>) attributes {dimension_semantics = [#tpu.dimension_semantics<parallel>], iteration_bounds = array<i64: 1>, scalar_prefetch = 0 : i64, scratch_operands = 0 : i64, tpu.core_type = #tpu.core_type<tc>, window_params = [{transform_indices = @transform_0, window_bounds = array<i64: 16, 13>}, {pipeline_mode = #tpu.pipeline_mode<synchronous>, transform_indices = @transform_1, window_bounds = array<i64: 13, 128>}, {pipeline_mode = #tpu.pipeline_mode<synchronous>, transform_indices = @transform_2, window_bounds = array<i64: 1, 128>}, {pipeline_mode = #tpu.pipeline_mode<synchronous>, transform_indices = @transform_3, window_bounds = array<i64: 128, 128>}, {pipeline_mode = #tpu.pipeline_mode<synchronous>, transform_indices = @transform_4, window_bounds = array<i64: 1, 128>}, {pipeline_mode = #tpu.pipeline_mode<synchronous>, transform_indices = @transform_5, window_bounds = array<i64: 128, 2>}, {pipeline_mode = #tpu.pipeline_mode<synchronous>, transform_indices = @transform_6, window_bounds = array<i64: 1, 2>}, {transform_indices = @transform_7, window_bounds = array<i64: 16, 2>}]} {
    %c0 = arith.constant 0 : index
    %c0_0 = arith.constant 0 : index
    %0 = vector.load %arg1[%c0, %c0_0] : memref<16x13xf32, #tpu.memory_space<vmem>>, vector<16x13xf32>
    %1 = arith.truncf %0 : vector<16x13xf32> to vector<16x13xbf16>
    %c0_1 = arith.constant 0 : index
    %c0_2 = arith.constant 0 : index
    %2 = vector.load %arg2[%c0_1, %c0_2] : memref<13x128xbf16, #tpu.memory_space<vmem>>, vector<13x128xbf16>
    %cst = arith.constant dense<0.000000e+00> : vector<16x128xf32>
    %3 = tpu.matmul %1, %2, %cst {dimension_numbers = #tpu.dot_dimension_numbers<[1], [0], [0], [1], [0, 0, 1, 1], [], []>} : vector<16x13xbf16>, vector<13x128xbf16>, vector<16x128xf32> -> vector<16x128xf32>
    %c0_3 = arith.constant 0 : index
    %c0_4 = arith.constant 0 : index
    %4 = vector.load %arg3[%c0_3, %c0_4] : memref<1x128xf32, #tpu.memory_space<vmem>>, vector<1x128xf32>
    %5 = vector.broadcast %4 : vector<1x128xf32> to vector<16x128xf32>
    %6 = arith.addf %3, %5 : vector<16x128xf32>
    %cst_5 = arith.constant 0.000000e+00 : f32
    %7 = vector.broadcast %cst_5 : f32 to vector<16x128xf32>
    %8 = arith.maximumf %6, %7 : vector<16x128xf32>
    %9 = arith.truncf %8 : vector<16x128xf32> to vector<16x128xbf16>
    %c0_6 = arith.constant 0 : index
    %c0_7 = arith.constant 0 : index
    %10 = vector.load %arg4[%c0_6, %c0_7] : memref<128x128xbf16, #tpu.memory_space<vmem>>, vector<128x128xbf16>
    %cst_8 = arith.constant dense<0.000000e+00> : vector<16x128xf32>
    %11 = tpu.matmul %9, %10, %cst_8 {dimension_numbers = #tpu.dot_dimension_numbers<[1], [0], [0], [1], [0, 0, 1, 1], [], []>} : vector<16x128xbf16>, vector<128x128xbf16>, vector<16x128xf32> -> vector<16x128xf32>
    %c0_9 = arith.constant 0 : index
    %c0_10 = arith.constant 0 : index
    %12 = vector.load %arg5[%c0_9, %c0_10] : memref<1x128xf32, #tpu.memory_space<vmem>>, vector<1x128xf32>
    %13 = vector.broadcast %12 : vector<1x128xf32> to vector<16x128xf32>
    %14 = arith.addf %11, %13 : vector<16x128xf32>
    %cst_11 = arith.constant 0.000000e+00 : f32
    %15 = vector.broadcast %cst_11 : f32 to vector<16x128xf32>
    %16 = arith.maximumf %14, %15 : vector<16x128xf32>
    %17 = arith.truncf %16 : vector<16x128xf32> to vector<16x128xbf16>
    %c0_12 = arith.constant 0 : index
    %c0_13 = arith.constant 0 : index
    %18 = vector.load %arg6[%c0_12, %c0_13] : memref<128x2xbf16, #tpu.memory_space<vmem>>, vector<128x2xbf16>
    %cst_14 = arith.constant dense<0.000000e+00> : vector<16x2xf32>
    %19 = tpu.matmul %17, %18, %cst_14 {dimension_numbers = #tpu.dot_dimension_numbers<[1], [0], [0], [1], [0, 0, 1, 1], [], []>} : vector<16x128xbf16>, vector<128x2xbf16>, vector<16x2xf32> -> vector<16x2xf32>
    %c0_15 = arith.constant 0 : index
    %c0_16 = arith.constant 0 : index
    %20 = vector.load %arg7[%c0_15, %c0_16] : memref<1x2xf32, #tpu.memory_space<vmem>>, vector<1x2xf32>
    %21 = vector.broadcast %20 : vector<1x2xf32> to vector<16x2xf32>
    %22 = arith.addf %19, %21 : vector<16x2xf32>
    %c0_17 = arith.constant 0 : index
    %c0_18 = arith.constant 0 : index
    %23 = vector.load %arg8[%c0_17, %c0_18] : memref<16x2xf32, #tpu.memory_space<vmem>>, vector<16x2xf32>
    tpu.vector_store %arg8[%c0_17, %c0_18], %22 {strides = array<i32>} : memref<16x2xf32, #tpu.memory_space<vmem>>, vector<16x2xf32>,
    return
  }
  func.func @transform_0(%arg0: i32) -> (i32, i32) {
    %c0_i32 = arith.constant 0 : i32
    %c0_i32_0 = arith.constant 0 : i32
    return %arg0, %c0_i32 : i32, i32
  }
  func.func @transform_1(%arg0: i32) -> (i32, i32) {
    %c0_i32 = arith.constant 0 : i32
    %c0_i32_0 = arith.constant 0 : i32
    %c0_i32_1 = arith.constant 0 : i32
    return %c0_i32, %c0_i32_0 : i32, i32
  }
  func.func @transform_2(%arg0: i32) -> (i32, i32) {
    %c0_i32 = arith.constant 0 : i32
    %c0_i32_0 = arith.constant 0 : i32
    %c0_i32_1 = arith.constant 0 : i32
    return %c0_i32, %c0_i32_0 : i32, i32
  }
  func.func @transform_3(%arg0: i32) -> (i32, i32) {
    %c0_i32 = arith.constant 0 : i32
    %c0_i32_0 = arith.constant 0 : i32
    %c0_i32_1 = arith.constant 0 : i32
    return %c0_i32, %c0_i32_0 : i32, i32
  }
  func.func @transform_4(%arg0: i32) -> (i32, i32) {
    %c0_i32 = arith.constant 0 : i32
    %c0_i32_0 = arith.constant 0 : i32
    %c0_i32_1 = arith.constant 0 : i32
    return %c0_i32, %c0_i32_0 : i32, i32
  }
  func.func @transform_5(%arg0: i32) -> (i32, i32) {
    %c0_i32 = arith.constant 0 : i32
    %c0_i32_0 = arith.constant 0 : i32
    %c0_i32_1 = arith.constant 0 : i32
    return %c0_i32, %c0_i32_0 : i32, i32
  }
  func.func @transform_6(%arg0: i32) -> (i32, i32) {
    %c0_i32 = arith.constant 0 : i32
    %c0_i32_0 = arith.constant 0 : i32
    %c0_i32_1 = arith.constant 0 : i32
    return %c0_i32, %c0_i32_0 : i32, i32
  }
  func.func @transform_7(%arg0: i32) -> (i32, i32) {
    %c0_i32 = arith.constant 0 : i32
    %c0_i32_0 = arith.constant 0 : i32
    return %arg0, %c0_i32 : i32, i32
  }
}

</mosaic_0001>

<llo_original>
// kernel: tpu_custom_call.1
$region0: #{tpu_custom_call.1}
  #allocation0 [shape = 'u32[]', space=smem, size = 0x4, offset = 0x4, fixed_abs, tag = 'smem constant byte address 0x4 - core index']
  #allocation1 [shape = 'u32[72,128]{1,0:T(1,128)}', space=vmem, size = 0x9000, scoped, tag = 'internal scratch']
  %s0 = inlined_call_operand.hbm [shape: f32[10,13], index: 0, kind: input, shape index: {}]
  %s1 = inlined_call_operand.hbm [shape: bf16[13,128], index: 1, kind: input, shape index: {}]
  %s2 = inlined_call_operand.vmem [shape: f32[1,128], index: 2, kind: input, shape index: {}]
  %s3 = inlined_call_operand.vmem [shape: bf16[128,128], index: 3, kind: input, shape index: {}]
  %s4 = inlined_call_operand.vmem [shape: f32[1,128], index: 4, kind: input, shape index: {}]
  %s5 = inlined_call_operand.vmem [shape: bf16[128,2], index: 5, kind: input, shape index: {}]
  %s6 = inlined_call_operand.vmem [shape: f32[1,2], index: 6, kind: input, shape index: {}]
  %s7 = inlined_call_operand.vmem [shape: f32[10,2], index: 7, kind: output, shape index: {}]
  %s8 = sld [smem:[#allocation0]]
  $region46: #{tpu_custom_call.1} parent=0
    _
  %s10 = ssub.s32 1, %s8
  %s11 = scalar_select 0, %s10, %s8
  $region1: #{tpu_custom_call.1} parent=0
    #allocation2 [shape = 'u8[8192]{0}', space=vmem, size = 0x2000, scoped, tag = 'input window, operand 0, single buffered']
    #allocation3 [shape = 's32[1]{0}', space=sflag, size = 0x4, scoped, tag = 'scoped memory for tpu_custom_call.1']
    #allocation4 [shape = 'u8[4096]{0}', space=vmem, size = 0x1000, scoped, tag = 'input window, operand 1, single buffered']
    #allocation5 [shape = 's32[1]{0}', space=sflag, size = 0x4, scoped, tag = 'scoped memory for tpu_custom_call.1']
    %12 = vsyncpa [#allocation3], 0
    %13 = vsyncpa [#allocation5], 0
    // Predicated region
    $region2: #{tpu_custom_call.1} parent=1 // pred_check
      _
    $region3: #{tpu_custom_call.1} parent=1 // pred_check_branch
      %15 = sbr.rel (0) target = $region5
    $region4: #{tpu_custom_call.1} parent=1 // pred_region
      %17 = vsyncadd [#allocation3], 0
      %s18 = sshll.u32 %s0, 4
      %s19 = int_to_ptr.hbm [resolvable:$true] %s18
      %s20 = sshll.u32 [#allocation2], 4
      %s21 = int_to_ptr.vmem [resolvable:$true] %s20
      %26 = dma.hbm_to_vmem [thread:$0]  %s19, 256, %s21, [#allocation3], 128, 128, 8
    $region5: #{tpu_custom_call.1} parent=1 // pred_fallthru
      _
    // Predicated region
    $region6: #{tpu_custom_call.1} parent=1 // pred_check
      _
    $region7: #{tpu_custom_call.1} parent=1 // pred_check_branch
      %28 = sbr.rel (0) target = $region9
    $region8: #{tpu_custom_call.1} parent=1 // pred_region
      %30 = vsyncadd [#allocation5], 0
      %s31 = sshll.u32 %s1, 4
      %s32 = int_to_ptr.hbm [resolvable:$true] %s31
      %s33 = sshll.u32 [#allocation4], 4
      %s34 = int_to_ptr.vmem [resolvable:$true] %s33
      %39 = dma.hbm_to_vmem [thread:$0]  %s32, 128, %s34, [#allocation5], 64, 64, 4
    $region9: #{tpu_custom_call.1} parent=1 // pred_fallthru
      _
    // Predicated region
    $region10: #{tpu_custom_call.1} parent=1 // pred_check
      _
    $region11: #{tpu_custom_call.1} parent=1 // pred_check_branch
      %41 = sbr.rel (0) target = $region13
    $region12: #{tpu_custom_call.1} parent=1 // pred_region
      _
    $region13: #{tpu_custom_call.1} parent=1 // pred_fallthru
      _
    // Predicated region
    $region14: #{tpu_custom_call.1} parent=1 // pred_check
      _
    $region15: #{tpu_custom_call.1} parent=1 // pred_check_branch
      %43 = sbr.rel (0) target = $region17
    $region16: #{tpu_custom_call.1} parent=1 // pred_region
      _
    $region17: #{tpu_custom_call.1} parent=1 // pred_fallthru
      _
    // Predicated region
    $region18: #{tpu_custom_call.1} parent=1 // pred_check
      _
    $region19: #{tpu_custom_call.1} parent=1 // pred_check_branch
      %45 = sbr.rel (0) target = $region21
    $region20: #{tpu_custom_call.1} parent=1 // pred_region
      _
    $region21: #{tpu_custom_call.1} parent=1 // pred_fallthru
      _
    // Predicated region
    $region22: #{tpu_custom_call.1} parent=1 // pred_check
      _
    $region23: #{tpu_custom_call.1} parent=1 // pred_check_branch
      %47 = sbr.rel (0) target = $region25
    $region24: #{tpu_custom_call.1} parent=1 // pred_region
      _
    $region25: #{tpu_custom_call.1} parent=1 // pred_fallthru
      _
    // Predicated region
    $region26: #{tpu_custom_call.1} parent=1 // pred_check
      _
    $region27: #{tpu_custom_call.1} parent=1 // pred_check_branch
      %49 = sbr.rel (0) target = $region29
    $region28: #{tpu_custom_call.1} parent=1 // pred_region
      _
    $region29: #{tpu_custom_call.1} parent=1 // pred_fallthru
      _
    // Predicated region
    $region30: #{tpu_custom_call.1} parent=1 // pred_check
      _
    $region31: #{tpu_custom_call.1} parent=1 // pred_check_branch
      %51 = sbr.rel (0) target = $region33
    $region32: #{tpu_custom_call.1} parent=1 // pred_region
      %53 = dma.done [#allocation3], 256
    $region33: #{tpu_custom_call.1} parent=1 // pred_fallthru
      _
    // Predicated region
    $region34: #{tpu_custom_call.1} parent=1 // pred_check
      _
    $region35: #{tpu_custom_call.1} parent=1 // pred_check_branch
      %55 = sbr.rel (0) target = $region37
    $region36: #{tpu_custom_call.1} parent=1 // pred_region
      %57 = dma.done [#allocation5], 128
    $region37: #{tpu_custom_call.1} parent=1 // pred_fallthru
      _
    %v59 = vld [vmem:[#allocation2] sm:$0xff]
    %v60 = vld [vmem:[#allocation2 + $0x8] sm:$0xff]
    %v61 = vpack.c.bf16 %v60, %v59
    %v62 = vld [vmem:[#allocation4] sm:$0xf]
    %v63 = vld [vmem:[#allocation4 + $0x4] sm:$0x7]
    %v64 = vld [vmem:[%s2] sm:$0x1]
    %v66 = vperm.slane %v64, 0
    %v70 = vunpack.c.l.b16 %v62
    %v71 = vunpack.c.l.b16 %v63
    %v72 = vpack.c.b16 %v71, %v70
    %vm73 = vcmask 105472
    %v75 = vsel %vm73, %v61, 0
    %vm77 = vcmask 1045504
    %vm78 = vcmask 1046528
    %v79 = vsel %vm77, 4294967295, 65535
    %v80 = vsel %vm78, %v79, 0
    %v82 = vand.u32 %v72, %v80
    %84 = vmatpush.bf16.msra.mxu0 0
    %85 = vmatpush.bf16.msra.mxu0 0
    %86 = vmatpush.bf16.msra.mxu0 0
    %87 = vmatpush.bf16.msra.mxu0 0
    %88 = vmatpush.bf16.msra.mxu0 0
    %89 = vmatpush.bf16.msra.mxu0 0
    %90 = vmatpush.bf16.msra.mxu0 0
    %91 = vmatpush.bf16.msra.mxu0 %v82
    %92 = vmatmul.bf16.gmra.mxu0 %v75
    %v93 = vpop.f32.mrf.mxu0
    %v94 = vadd.f32 %v66, %v93
    %v95 = vpop.f32.mrf.mxu0
    %v96 = vadd.f32 %v66, %v95
    %97 = vdwg.mxu0
    %v98 = vmax.f32 %v94, 0.0
    %v99 = vmax.f32 %v96, 0.0
    %v100 = vpack.c.bf16 %v99, %v98
    %v101 = vld [vmem:[%s3] sm:$0xf]
    %v102 = vld [vmem:[%s3 + $0x4] sm:$0xf]
    %v103 = vld [vmem:[%s3 + $0x8] sm:$0xf]
    %v104 = vld [vmem:[%s3 + $0xc] sm:$0xf]
    %v105 = vld [vmem:[%s3 + $0x10] sm:$0xf]
    %v106 = vld [vmem:[%s3 + $0x14] sm:$0xf]
    %v107 = vld [vmem:[%s3 + $0x18] sm:$0xf]
    %v108 = vld [vmem:[%s3 + $0x1c] sm:$0xf]
    %v109 = vld [vmem:[%s3 + $0x20] sm:$0xf]
    %v110 = vld [vmem:[%s3 + $0x24] sm:$0xf]
    %v111 = vld [vmem:[%s3 + $0x28] sm:$0xf]
    %v112 = vld [vmem:[%s3 + $0x2c] sm:$0xf]
    %v113 = vld [vmem:[%s3 + $0x30] sm:$0xf]
    %v114 = vld [vmem:[%s3 + $0x34] sm:$0xf]
    %v115 = vld [vmem:[%s3 + $0x38] sm:$0xf]
    %v116 = vld [vmem:[%s3 + $0x3c] sm:$0xf]
    %v117 = vld [vmem:[%s4] sm:$0x1]
    %v119 = vperm.slane %v117, 0
    %v137 = vunpack.c.l.b16 %v101
    %v138 = vunpack.c.l.b16 %v102
    %v139 = vunpack.c.l.b16 %v103
    %v140 = vunpack.c.l.b16 %v104
    %v141 = vunpack.c.l.b16 %v105
    %v142 = vunpack.c.l.b16 %v106
    %v143 = vunpack.c.l.b16 %v107
    %v144 = vunpack.c.l.b16 %v108
    %v145 = vunpack.c.l.b16 %v109
    %v146 = vunpack.c.l.b16 %v110
    %v147 = vunpack.c.l.b16 %v111
    %v148 = vunpack.c.l.b16 %v112
    %v149 = vunpack.c.l.b16 %v113
    %v150 = vunpack.c.l.b16 %v114
    %v151 = vunpack.c.l.b16 %v115
    %v152 = vunpack.c.l.b16 %v116
    %v153 = vpack.c.b16 %v138, %v137
    %v154 = vpack.c.b16 %v140, %v139
    %v155 = vpack.c.b16 %v142, %v141
    %v156 = vpack.c.b16 %v144, %v143
    %v157 = vpack.c.b16 %v146, %v145
    %v158 = vpack.c.b16 %v148, %v147
    %v159 = vpack.c.b16 %v150, %v149
    %v160 = vpack.c.b16 %v152, %v151
    %169 = vmatpush.bf16.msra.mxu0 %v160
    %170 = vmatpush.bf16.msra.mxu0 %v159
    %171 = vmatpush.bf16.msra.mxu0 %v158
    %172 = vmatpush.bf16.msra.mxu0 %v157
    %173 = vmatpush.bf16.msra.mxu0 %v156
    %174 = vmatpush.bf16.msra.mxu0 %v155
    %175 = vmatpush.bf16.msra.mxu0 %v154
    %176 = vmatpush.bf16.msra.mxu0 %v153
    %177 = vmatmul.bf16.gmra.mxu0 %v100
    %v178 = vpop.f32.mrf.mxu0
    %v179 = vadd.f32 %v119, %v178
    %v180 = vpop.f32.mrf.mxu0
    %v181 = vadd.f32 %v119, %v180
    %182 = vdwg.mxu0
    %v183 = vmax.f32 %v179, 0.0
    %v184 = vmax.f32 %v181, 0.0
    %v185 = vpack.c.bf16 %v184, %v183
    %v186 = vld [vmem:[%s5] sm:$0xf]
    %v187 = vld [vmem:[%s5 + $0x4] sm:$0xf]
    %v188 = vld [vmem:[%s5 + $0x8] sm:$0xf]
    %v189 = vld [vmem:[%s5 + $0xc] sm:$0xf]
    %v190 = vld [vmem:[%s5 + $0x10] sm:$0xf]
    %v191 = vld [vmem:[%s5 + $0x14] sm:$0xf]
    %v192 = vld [vmem:[%s5 + $0x18] sm:$0xf]
    %v193 = vld [vmem:[%s5 + $0x1c] sm:$0xf]
    %v194 = vld [vmem:[%s5 + $0x20] sm:$0xf]
    %v195 = vld [vmem:[%s5 + $0x24] sm:$0xf]
    %v196 = vld [vmem:[%s5 + $0x28] sm:$0xf]
    %v197 = vld [vmem:[%s5 + $0x2c] sm:$0xf]
    %v198 = vld [vmem:[%s5 + $0x30] sm:$0xf]
    %v199 = vld [vmem:[%s5 + $0x34] sm:$0xf]
    %v200 = vld [vmem:[%s5 + $0x38] sm:$0xf]
    %v201 = vld [vmem:[%s5 + $0x3c] sm:$0xf]
    %v202 = vld [vmem:[%s6] sm:$0x1]
    %v204 = vperm.slane %v202, 0
    %v222 = vunpack.c.l.b16 %v186
    %v223 = vunpack.c.l.b16 %v187
    %v224 = vunpack.c.l.b16 %v188
    %v225 = vunpack.c.l.b16 %v189
    %v226 = vunpack.c.l.b16 %v190
    %v227 = vunpack.c.l.b16 %v191
    %v228 = vunpack.c.l.b16 %v192
    %v229 = vunpack.c.l.b16 %v193
    %v230 = vunpack.c.l.b16 %v194
    %v231 = vunpack.c.l.b16 %v195
    %v232 = vunpack.c.l.b16 %v196
    %v233 = vunpack.c.l.b16 %v197
    %v234 = vunpack.c.l.b16 %v198
    %v235 = vunpack.c.l.b16 %v199
    %v236 = vunpack.c.l.b16 %v200
    %v237 = vunpack.c.l.b16 %v201
    %v238 = vpack.c.b16 %v223, %v222
    %v239 = vpack.c.b16 %v225, %v224
    %v240 = vpack.c.b16 %v227, %v226
    %v241 = vpack.c.b16 %v229, %v228
    %v242 = vpack.c.b16 %v231, %v230
    %v243 = vpack.c.b16 %v233, %v232
    %v244 = vpack.c.b16 %v235, %v234
    %v245 = vpack.c.b16 %v237, %v236
    %254 = vmatpush.bf16.msra.mxu0 %v245
    %255 = vmatpush.bf16.msra.mxu0 %v244
    %256 = vmatpush.bf16.msra.mxu0 %v243
    %257 = vmatpush.bf16.msra.mxu0 %v242
    %258 = vmatpush.bf16.msra.mxu0 %v241
    %259 = vmatpush.bf16.msra.mxu0 %v240
    %260 = vmatpush.bf16.msra.mxu0 %v239
    %261 = vmatpush.bf16.msra.mxu0 %v238
    %262 = vmatmul.bf16.gmra.mxu0 %v185
    %v263 = vpop.f32.mrf.mxu0
    %v264 = vadd.f32 %v204, %v263
    %v265 = vpop.f32.mrf.mxu0
    %v266 = vadd.f32 %v204, %v265
    %267 = vdwg.mxu0
    %vm268 = vcmask 15360
    %269 = vst.msk [vmem:[%s7] sm:$0xff] %vm268, %v264
    %270 = vst.msk [vmem:[%s7 + $0x8] sm:$0xff] %vm268, %v266
    // Predicated region
    $region38: #{tpu_custom_call.1} parent=1 // pred_check
      _
    $region39: #{tpu_custom_call.1} parent=1 // pred_check_branch
      %272 = sbr.rel (0) target = $region41
    $region40: #{tpu_custom_call.1} parent=1 // pred_region
      _
    $region41: #{tpu_custom_call.1} parent=1 // pred_fallthru
      _
    // Predicated region
    $region42: #{tpu_custom_call.1} parent=1 // pred_check
      _
    $region43: #{tpu_custom_call.1} parent=1 // pred_check_branch
      %274 = sbr.rel (0) target = $region45
    $region44: #{tpu_custom_call.1} parent=1 // pred_region
      _
    $region45: #{tpu_custom_call.1} parent=1 // pred_fallthru
      _
    %275 = vsyncpa [#allocation3], 1
    %276 = vsyncpa [#allocation5], 1

</llo_original>
